<compile_context>
chip_gen: v7x
topology: tpu7x:2x2x1
jax: 0.10.0
libtpu: 0.0.40
codegen_flags: <defaults>
</compile_context>

<pallas_src>
import functools

import jax
import jax.numpy as jnp
from jax import lax
from jax.experimental import pallas as pl
from jax.experimental.pallas import tpu as pltpu


# --------------------- generation-aware budgets -----------------------------

def _tpu_vmem_capacity():
    try:
        return int(pltpu.get_tpu_info().vmem_capacity_bytes)
    except Exception:
        return 64 * 1024 * 1024          # conservative: v7x per-TC VMEM

_VMEM_CAP = _tpu_vmem_capacity()
_VMEM_LIMIT = min(int(_VMEM_CAP * 3 // 4), 100 * 1024 * 1024)   # 48 MiB on v7x, ~96 MiB on v5e/v6e
_TILE_TARGET = 1024 if _VMEM_CAP > 64 * 1024 * 1024 else 512    # bigger row tiles on 128-MiB parts


def _cparams(sem):
    return pltpu.CompilerParams(dimension_semantics=sem,
                                vmem_limit_bytes=_VMEM_LIMIT)


def _pick_tile_m(m, target=None, min_steps=4):
    """Largest sublane-aligned (x8) row tile <= target dividing m that keeps at
    least `min_steps` grid steps (software pipelining + v7x dual-TC split).
    Falls back to the smallest aligned divisor (max #steps) for small M, and
    to the full extent only when M itself is below one sublane group."""
    if target is None:
        target = _TILE_TARGET
    if m % 8 != 0 or m <= 8:
        return m
    divisors = [t for t in range(8, min(target, m) + 1, 8) if m % t == 0]
    if not divisors:
        return m
    pipelined = [t for t in divisors if m // t >= min_steps]
    return max(pipelined) if pipelined else min(divisors)


# ----------------------------- Pallas kernels -------------------------------

def _dense_kernel(x_ref, w_ref, b_ref, o_ref, *, activation):
    # bf16 MXU inputs, f32 accumulation / epilogue.
    x = x_ref[...].astype(jnp.bfloat16)
    y = jnp.dot(x, w_ref[...], preferred_element_type=jnp.float32) + b_ref[...]
    if activation == "gelu":
        # TODO(synk): HF/PyTorch BERT "gelu" is the exact erf form; tanh
        # approximation kept here (guaranteed Mosaic lowering, tiny drift).
        y = jax.nn.gelu(y)
    o_ref[...] = y.astype(o_ref.dtype)


def dense(x, w, b, activation=None, out_dtype=jnp.bfloat16):
    """x: (M, K), w: (K, N) bf16, b: (1, N) f32 -> (M, N)."""
    m, k = x.shape
    n = w.shape[1]
    tm = _pick_tile_m(m)
    # TODO(synk): add N (and K) tiling with a VMEM f32 accumulator and
    # pl.when init/finalize once the full (K, N) weight no longer fits VMEM.
    return pl.pallas_call(
        functools.partial(_dense_kernel, activation=activation),
        grid=(m // tm,),
        in_specs=[pl.BlockSpec((tm, k), lambda i: (i, 0)),
                  pl.BlockSpec((k, n), lambda i: (0, 0)),
                  pl.BlockSpec((1, n), lambda i: (0, 0))],
        out_specs=pl.BlockSpec((tm, n), lambda i: (i, 0)),
        out_shape=jax.ShapeDtypeStruct((m, n), out_dtype),
        compiler_params=_cparams(("parallel",)),
    )(x, w, b)


def _dense_res_ln_kernel(x_ref, w_ref, b_ref, res_ref, g_ref, beta_ref, o_ref,
                         *, eps):
    # fused: (x @ w + b) + residual, then LayerNorm — one HBM round trip.
    # Stats / residual math in f32, bf16 activation written out.
    x = x_ref[...].astype(jnp.bfloat16)
    y = jnp.dot(x, w_ref[...], preferred_element_type=jnp.float32) + b_ref[...]
    z = res_ref[...].astype(jnp.float32) + y
    mean = jnp.mean(z, axis=-1, keepdims=True)
    var = jnp.mean((z - mean) ** 2, axis=-1, keepdims=True)
    inv = lax.rsqrt(var + eps)
    o_ref[...] = (((z - mean) * inv) * g_ref[...] + beta_ref[...]).astype(o_ref.dtype)


def dense_res_ln(x, w, b, res, g, beta, eps=1e-12):
    """LayerNorm(res + x @ w + b).  x:(M,K), w:(K,N), res:(M,N) -> (M,N) bf16."""
    m, k = x.shape
    n = w.shape[1]
    tm = _pick_tile_m(m)
    return pl.pallas_call(
        functools.partial(_dense_res_ln_kernel, eps=eps),
        grid=(m // tm,),
        in_specs=[pl.BlockSpec((tm, k), lambda i: (i, 0)),
                  pl.BlockSpec((k, n), lambda i: (0, 0)),
                  pl.BlockSpec((1, n), lambda i: (0, 0)),
                  pl.BlockSpec((tm, n), lambda i: (i, 0)),
                  pl.BlockSpec((1, n), lambda i: (0, 0)),
                  pl.BlockSpec((1, n), lambda i: (0, 0))],
        out_specs=pl.BlockSpec((tm, n), lambda i: (i, 0)),
        out_shape=jax.ShapeDtypeStruct((m, n), jnp.bfloat16),
        compiler_params=_cparams(("parallel",)),
    )(x, w, b, res, g, beta)


def _layernorm_kernel(x_ref, g_ref, b_ref, o_ref, *, eps):
    x = x_ref[...].astype(jnp.float32)
    mean = jnp.mean(x, axis=-1, keepdims=True)
    var = jnp.mean((x - mean) ** 2, axis=-1, keepdims=True)
    inv = lax.rsqrt(var + eps)
    o_ref[...] = (((x - mean) * inv) * g_ref[...] + b_ref[...]).astype(o_ref.dtype)


def layernorm(x, g, b, eps=1e-12):
    """Embedding LayerNorm.  x: (M, H) f32, g/b: (H,) -> (M, H) bf16."""
    m, h = x.shape
    tm = _pick_tile_m(m)
    return pl.pallas_call(
        functools.partial(_layernorm_kernel, eps=eps),
        grid=(m // tm,),
        in_specs=[pl.BlockSpec((tm, h), lambda i: (i, 0)),
                  pl.BlockSpec((1, h), lambda i: (0, 0)),
                  pl.BlockSpec((1, h), lambda i: (0, 0))],
        out_specs=pl.BlockSpec((tm, h), lambda i: (i, 0)),
        out_shape=jax.ShapeDtypeStruct((m, h), jnp.bfloat16),
        compiler_params=_cparams(("parallel",)),
    )(x, g.reshape(1, h), b.reshape(1, h))


def _attention_kernel(qkv_ref, bias_ref, o_ref, *, nh, dh, scale):
    # One batch row per program: all heads are read from the fused (S, 3H) QKV
    # slab (layout [Q heads | K heads | V heads]) and the per-head outputs are
    # concatenated and stored ONCE as a lane-dense (S, H) block.
    H = nh * dh
    bias = bias_ref[0]                                 # (1, S) f32 additive key mask
    outs = []
    for hi in range(nh):                               # nh is static -> unrolled
        # fold 1/sqrt(dh) into q (S*dh bf16 mults instead of S*S f32 mults)
        q = qkv_ref[0, :, hi * dh:(hi + 1) * dh] * scale              # (S, dh) bf16
        k = qkv_ref[0, :, H + hi * dh:H + (hi + 1) * dh]              # (S, dh) bf16
        v = qkv_ref[0, :, 2 * H + hi * dh:2 * H + (hi + 1) * dh]      # (S, dh) bf16
        # contract last dims directly — no in-kernel transpose of k.
        s = lax.dot_general(q, k, (((1,), (1,)), ((), ())),
                            preferred_element_type=jnp.float32)
        s = s + bias
        s = s - jnp.max(s, axis=-1, keepdims=True)
        p = jnp.exp(s)
        p = p * pl.reciprocal(jnp.sum(p, axis=-1, keepdims=True), approx=True)
        outs.append(jnp.dot(p.astype(jnp.bfloat16), v,
                            preferred_element_type=jnp.float32))
        # TODO(synk): at production S, tile the key dimension here
        # (flash-style online softmax) instead of the full (S, S) score matrix.
    o_ref[0] = jnp.concatenate(outs, axis=-1).astype(o_ref.dtype)


def attention(qkv, mask_bias, nh, dh):
    """qkv: (B, S, 3H) bf16, mask_bias: (B, 1, S) f32 -> (B, S, H) bf16."""
    b, s, three_h = qkv.shape
    h = three_h // 3
    scale = 1.0 / float(dh) ** 0.5
    return pl.pallas_call(
        functools.partial(_attention_kernel, nh=nh, dh=dh, scale=scale),
        grid=(b,),
        in_specs=[pl.BlockSpec((1, s, three_h), lambda bi: (bi, 0, 0)),
                  pl.BlockSpec((1, 1, s), lambda bi: (bi, 0, 0))],
        out_specs=pl.BlockSpec((1, s, h), lambda bi: (bi, 0, 0)),
        out_shape=jax.ShapeDtypeStruct((b, s, h), jnp.bfloat16),
        compiler_params=_cparams(("parallel",)),
    )(qkv, mask_bias)


def _head_kernel(x_ref, w_ref, b_ref, o_ref):
    # logits_i = head(dropout_i(x)); dropout is identity at inference, so the
    # 5-branch average collapses exactly to a single matmul + bias.
    x = x_ref[...].astype(jnp.bfloat16)
    o_ref[...] = (jnp.dot(x, w_ref[...], preferred_element_type=jnp.float32)
                  + b_ref[...])


def head(x, w_pad, b_pad, num_labels):
    """x: (M, H); w_pad: (H, Np) zero-padded to a multiple of 128 lanes."""
    m, k = x.shape
    n = w_pad.shape[1]
    tm = _pick_tile_m(m)
    out = pl.pallas_call(
        _head_kernel,
        grid=(m // tm,),
        in_specs=[pl.BlockSpec((tm, k), lambda i: (i, 0)),
                  pl.BlockSpec((k, n), lambda i: (0, 0)),
                  pl.BlockSpec((1, n), lambda i: (0, 0))],
        out_specs=pl.BlockSpec((tm, n), lambda i: (i, 0)),
        out_shape=jax.ShapeDtypeStruct((m, n), jnp.float32),
        compiler_params=_cparams(("parallel",)),
    )(x, w_pad, b_pad)
    return out[:, :num_labels]


# ----------------------------- parameter init -------------------------------

def init_params(key, *, vocab, max_pos, hidden, n_heads, inter, n_layers,
                num_labels):
    ks = iter(jax.random.split(key, 8 + 12 * n_layers))

    def nrm(shape, dtype=jnp.bfloat16):
        return (0.02 * jax.random.normal(next(ks), shape)).astype(dtype)

    labels_pad = max(128, ((num_labels + 127) // 128) * 128)
    head_w = jnp.zeros((hidden, labels_pad), jnp.bfloat16)
    head_w = head_w.at[:, :num_labels].set(nrm((hidden, num_labels)))

    # TODO(synk): on v7x the dense weights could be stored fp8 with
    # per-output-channel scales (MXU-native there); kept bf16 here.
    params = {
        "num_heads": n_heads,
        "num_labels": num_labels,
        "word_emb": nrm((vocab, hidden), jnp.float32),
        "pos_emb": nrm((max_pos, hidden), jnp.float32),
        "emb_ln_g": jnp.ones((hidden,), jnp.float32),
        "emb_ln_b": jnp.zeros((hidden,), jnp.float32),
        "head_w": head_w,                                   # (H, 128·k) bf16
        "head_b": jnp.zeros((1, labels_pad), jnp.float32),
        "layers": [],
    }
    for _ in range(n_layers):
        wq, wk, wv = (nrm((hidden, hidden)), nrm((hidden, hidden)),
                      nrm((hidden, hidden)))
        layer = {
            "wqkv": jnp.concatenate([wq, wk, wv], axis=1),  # (H, 3H) bf16
            "bqkv": jnp.zeros((1, 3 * hidden), jnp.float32),
            "wo": nrm((hidden, hidden)),
            "bo": jnp.zeros((1, hidden), jnp.float32),
            "ln1_g": jnp.ones((1, hidden), jnp.float32),
            "ln1_b": jnp.zeros((1, hidden), jnp.float32),
            "w1": nrm((hidden, inter)),
            "b1": jnp.zeros((1, inter), jnp.float32),
            "w2": nrm((inter, hidden)),
            "b2": jnp.zeros((1, hidden), jnp.float32),
            "ln2_g": jnp.ones((1, hidden), jnp.float32),
            "ln2_b": jnp.zeros((1, hidden), jnp.float32),
        }
        params["layers"].append(layer)
    return params


# ------------------------------ forward pass --------------------------------

def feedback_model_forward(params, input_ids, mask):
    B, S = input_ids.shape
    H = params["word_emb"].shape[1]
    nh = params["num_heads"]
    dh = H // nh
    num_labels = params["num_labels"]
    M = B * S

    # --- backbone embeddings (gather stays in JAX glue) ---
    h = params["word_emb"][input_ids] + params["pos_emb"][:S][None, :, :]
    h2d = layernorm(h.reshape(M, H), params["emb_ln_g"], params["emb_ln_b"])  # (M,H) bf16

    # additive key-mask bias, ONE copy per batch row; attention reads it once
    # per program (no (B*nh, 1, S) broadcast in HBM).
    mask_bias = ((1.0 - mask.astype(jnp.float32)) * -1e9).reshape(B, 1, S)

    # --- transformer encoder layers ---
    for layer in params["layers"]:
        # fused Q/K/V projection: one matmul against the concatenated weight.
        qkv = dense(h2d, layer["wqkv"], layer["bqkv"])           # (M, 3H) bf16
        qkv = qkv.reshape(B, S, 3 * H)                           # free view (no transpose)
        attn = attention(qkv, mask_bias, nh, dh)                 # (B, S, H) bf16
        attn2d = attn.reshape(M, H)                              # free view (no transpose)

        # out-projection + residual + LayerNorm fused in one kernel.
        h2d = dense_res_ln(attn2d, layer["wo"], layer["bo"], h2d,
                           layer["ln1_g"], layer["ln1_b"])
        # FFN: up-projection + GELU, then down-projection + residual + LN fused.
        ffn = dense(h2d, layer["w1"], layer["b1"], activation="gelu")
        h2d = dense_res_ln(ffn, layer["w2"], layer["b2"], h2d,
                           layer["ln2_g"], layer["ln2_b"])

    # --- 5x dropout (identity at inference) + shared head, averaged == 1 matmul ---
    logits = head(h2d, params["head_w"], params["head_b"], num_labels)
    return logits.reshape(B, S, num_labels)


# ---------------------------------- main -------------------------------------

if __name__ == "__main__":
    B, S = 2, 8
    HIDDEN, N_HEADS, INTER, N_LAYERS = 32, 4, 64, 2
    VOCAB, MAX_POS, NUM_LABELS = 50, 64, 3

    key = jax.random.PRNGKey(0)
    k_param, k_ids = jax.random.split(key)

    params = init_params(k_param, vocab=VOCAB, max_pos=MAX_POS, hidden=HIDDEN,
                         n_heads=N_HEADS, inter=INTER, n_layers=N_LAYERS,
                         num_labels=NUM_LABELS)

    input_ids = jax.random.randint(k_ids, (B, S), 0, VOCAB, dtype=jnp.int32)
    mask = jnp.ones((B, S), jnp.int32).at[1, -2:].set(0)   # pad last 2 of row 1

    logits = feedback_model_forward(params, input_ids, mask)
    jax.block_until_ready(logits)
    assert logits.shape == (B, S, NUM_LABELS)
    print("KERNEL_OK")
</pallas_src>

<mosaic_0001>
module attributes {stable_mosaic.version = 11 : i64} {
  func.func @_layernorm_kernel(%arg0: i32, %arg1: memref<8x32xf32, #tpu.memory_space<vmem>>, %arg2: memref<1x32xf32, #tpu.memory_space<vmem>>, %arg3: memref<1x32xf32, #tpu.memory_space<vmem>>, %arg4: memref<8x32xbf16, #tpu.memory_space<vmem>>) attributes {dimension_semantics = [#tpu.dimension_semantics<parallel>], iteration_bounds = array<i64: 2>, scalar_prefetch = 0 : i64, scratch_operands = 0 : i64, tpu.core_type = #tpu.core_type<tc>, window_params = [{transform_indices = @transform_0, window_bounds = array<i64: 8, 32>}, {pipeline_mode = #tpu.pipeline_mode<synchronous>, transform_indices = @transform_1, window_bounds = array<i64: 1, 32>}, {pipeline_mode = #tpu.pipeline_mode<synchronous>, transform_indices = @transform_2, window_bounds = array<i64: 1, 32>}, {transform_indices = @transform_3, window_bounds = array<i64: 8, 32>}]} {
    %c0 = arith.constant 0 : index
    %c0_0 = arith.constant 0 : index
    %0 = vector.load %arg1[%c0, %c0_0] : memref<8x32xf32, #tpu.memory_space<vmem>>, vector<8x32xf32>
    %cst = arith.constant dense<0.000000e+00> : vector<8xf32>
    %1 = vector.multi_reduction <add>, %0, %cst [1] : vector<8x32xf32> to vector<8xf32>
    %2 = vector.shape_cast %1 : vector<8xf32> to vector<8x1xf32>
    %cst_1 = arith.constant 3.200000e+01 : f32
    %3 = vector.broadcast %cst_1 : f32 to vector<8x1xf32>
    %4 = arith.divf %2, %3 : vector<8x1xf32>
    %5 = vector.broadcast %4 : vector<8x1xf32> to vector<8x32xf32>
    %6 = arith.subf %0, %5 : vector<8x32xf32>
    %7 = arith.mulf %6, %6 : vector<8x32xf32>
    %cst_2 = arith.constant dense<0.000000e+00> : vector<8xf32>
    %8 = vector.multi_reduction <add>, %7, %cst_2 [1] : vector<8x32xf32> to vector<8xf32>
    %9 = vector.shape_cast %8 : vector<8xf32> to vector<8x1xf32>
    %cst_3 = arith.constant 3.200000e+01 : f32
    %10 = vector.broadcast %cst_3 : f32 to vector<8x1xf32>
    %11 = arith.divf %9, %10 : vector<8x1xf32>
    %cst_4 = arith.constant 9.99999996E-13 : f32
    %12 = vector.broadcast %cst_4 : f32 to vector<8x1xf32>
    %13 = arith.addf %11, %12 : vector<8x1xf32>
    %14 = math.rsqrt %13 : vector<8x1xf32>
    %15 = vector.broadcast %4 : vector<8x1xf32> to vector<8x32xf32>
    %16 = arith.subf %0, %15 : vector<8x32xf32>
    %17 = vector.broadcast %14 : vector<8x1xf32> to vector<8x32xf32>
    %18 = arith.mulf %16, %17 : vector<8x32xf32>
    %c0_5 = arith.constant 0 : index
    %c0_6 = arith.constant 0 : index
    %19 = vector.load %arg2[%c0_5, %c0_6] : memref<1x32xf32, #tpu.memory_space<vmem>>, vector<1x32xf32>
    %20 = vector.broadcast %19 : vector<1x32xf32> to vector<8x32xf32>
    %21 = arith.mulf %18, %20 : vector<8x32xf32>
    %c0_7 = arith.constant 0 : index
    %c0_8 = arith.constant 0 : index
    %22 = vector.load %arg3[%c0_7, %c0_8] : memref<1x32xf32, #tpu.memory_space<vmem>>, vector<1x32xf32>
    %23 = vector.broadcast %22 : vector<1x32xf32> to vector<8x32xf32>
    %24 = arith.addf %21, %23 : vector<8x32xf32>
    %25 = arith.truncf %24 : vector<8x32xf32> to vector<8x32xbf16>
    %c0_9 = arith.constant 0 : index
    %c0_10 = arith.constant 0 : index
    %26 = vector.load %arg4[%c0_9, %c0_10] : memref<8x32xbf16, #tpu.memory_space<vmem>>, vector<8x32xbf16>
    tpu.vector_store %arg4[%c0_9, %c0_10], %25 {strides = array<i32>} : memref<8x32xbf16, #tpu.memory_space<vmem>>, vector<8x32xbf16>,
    return
  }
  func.func @transform_0(%arg0: i32) -> (i32, i32) {
    %c0_i32 = arith.constant 0 : i32
    %c0_i32_0 = arith.constant 0 : i32
    return %arg0, %c0_i32 : i32, i32
  }
  func.func @transform_1(%arg0: i32) -> (i32, i32) {
    %c0_i32 = arith.constant 0 : i32
    %c0_i32_0 = arith.constant 0 : i32
    %c0_i32_1 = arith.constant 0 : i32
    return %c0_i32, %c0_i32_0 : i32, i32
  }
  func.func @transform_2(%arg0: i32) -> (i32, i32) {
    %c0_i32 = arith.constant 0 : i32
    %c0_i32_0 = arith.constant 0 : i32
    %c0_i32_1 = arith.constant 0 : i32
    return %c0_i32, %c0_i32_0 : i32, i32
  }
  func.func @transform_3(%arg0: i32) -> (i32, i32) {
    %c0_i32 = arith.constant 0 : i32
    %c0_i32_0 = arith.constant 0 : i32
    return %arg0, %c0_i32 : i32, i32
  }
}

</mosaic_0001>

<llo_original>
// kernel: tpu_custom_call.1
$region0: #{tpu_custom_call.1}
  #allocation0 [shape = 'u32[]', space=smem, size = 0x4, offset = 0x4, fixed_abs, tag = 'smem constant byte address 0x4 - core index']
  #allocation1 [shape = 'u32[144,128]{1,0:T(1,128)}', space=vmem, size = 0x12000, scoped, tag = 'internal scratch']
  %s0 = inlined_call_operand.hbm [shape: f32[16,32], index: 0, kind: input, shape index: {}]
  %s1 = inlined_call_operand.vmem [shape: f32[1,32], index: 1, kind: input, shape index: {}]
  %s2 = inlined_call_operand.vmem [shape: f32[1,32], index: 2, kind: input, shape index: {}]
  %s3 = inlined_call_operand.hbm [shape: bf16[16,32], index: 3, kind: output, shape index: {}]
  %s4 = sld [smem:[#allocation0]]
  $region49: #{tpu_custom_call.1} parent=0
    _
  %s6 = ssub.s32 1, %s4
  %s7 = scalar_select 0, %s6, %s4
  $region1: #{tpu_custom_call.1} parent=0
    #allocation2 [shape = 'u8[8192]{0}', space=vmem, size = 0x2000, scoped, tag = 'input window, operand 0']
    #allocation3 [shape = 's32[2]{0}', space=sflag, size = 0x8, scoped, tag = 'scoped memory for tpu_custom_call.1']
    #allocation4 [shape = 's32[2]{0}', space=sflag, size = 0x8, scoped, tag = 'scoped memory for tpu_custom_call.1']
    #allocation5 [shape = 'u8[4096]{0}', space=vmem, size = 0x1000, scoped, tag = 'output window, operand 0']
    %8 = vsyncpa [#allocation3], 0
    %s9 = scalar_lea.sflag [#allocation3], 1
    %10 = vsyncpa %s9, 0
    %11 = vsyncpa [#allocation4], 0
    %s12 = scalar_lea.sflag [#allocation4], 1
    %13 = vsyncpa %s12, 0
    loop: start=0, step=1, limit=4
    $region2: #{tpu_custom_call.1} parent=1 // loop_pre_header
      _
    $region3: #{tpu_custom_call.1} parent=1 // loop_header
      %s15 = sphi 0, %s19
      %p16 = scmp.ge.s32.totalorder %s15, 4
      %s25 = sphi 0, %s27
      %s28 = sphi 0, %s25
      %s29 = sphi 0, %s28
      %s45 = sphi 0, %s29
      %s49 = sphi 0, %s49
      %s51 = sphi 0, %s49
      %s52 = sphi 0, %s51
      %s66 = sphi 0, %s52
      %s70 = sphi 0, %s70
      %s72 = sphi 0, %s70
      %s73 = sphi 0, %s72
      %s87 = sphi 0, %s73
      %s93 = sphi 0, %s95
      %s96 = sphi 0, %s93
      %s97 = sphi 0, %s96
      %s113 = sphi 0, %s97
    $region4: #{tpu_custom_call.1} parent=1 // loop_header_branch
      %18 = sbr.rel (%p16) target = $region8
    $region5: #{tpu_custom_call.1} parent=1 // loop_body
      %s20 = ssub.s32 %s15, 1
      %s21 = ssub.s32 %s15, 2
      %s22 = sadd.s32 %s15, 1
      %s23 = ssub.s32 %s15, %s22
      %p24 = scmp.eq.s32.totalorder %s23, 0
      %s26 = sadd.s32 %s25, 1
      %s27 = scalar_select %p24, %s25, %s26
      %p30 = pneg %p24
      %p31 = scmp.eq.s32.totalorder %s15, 1
      %p32 = por %p30, %p31
      %p33 = scmp.ne.s32.totalorder %s25, %s28
      %p34 = scmp.eq.s32.totalorder %s15, 0
      %p35 = por %p33, %p34
      %p36 = scmp.ne.s32.totalorder %s25, %s28
      %p37 = scmp.eq.s32.totalorder %s20, 1
      %p38 = por %p36, %p37
      %p39 = scmp.ne.s32.totalorder %s28, %s29
      %p40 = scmp.eq.s32.totalorder %s20, 0
      %p41 = por %p39, %p40
      %p42 = scmp.ne.s32.totalorder %s28, %s29
      %p43 = scmp.eq.s32.totalorder %s21, 1
      %p44 = por %p42, %p43
      %p46 = scmp.ne.s32.totalorder %s29, %s45
      %p47 = scmp.eq.s32.totalorder %s21, 0
      %p48 = por %p46, %p47
      %s50 = sadd.s32 %s49, 1
      %p53 = scmp.eq.s32.totalorder %s15, 1
      %p54 = scmp.ne.s32.totalorder %s49, %s51
      %p55 = scmp.eq.s32.totalorder %s15, 0
      %p56 = por %p54, %p55
      %p57 = scmp.ne.s32.totalorder %s49, %s51
      %p58 = scmp.eq.s32.totalorder %s20, 1
      %p59 = por %p57, %p58
      %p60 = scmp.ne.s32.totalorder %s51, %s52
      %p61 = scmp.eq.s32.totalorder %s20, 0
      %p62 = por %p60, %p61
      %p63 = scmp.ne.s32.totalorder %s51, %s52
      %p64 = scmp.eq.s32.totalorder %s21, 1
      %p65 = por %p63, %p64
      %p67 = scmp.ne.s32.totalorder %s52, %s66
      %p68 = scmp.eq.s32.totalorder %s21, 0
      %p69 = por %p67, %p68
      %s71 = sadd.s32 %s70, 1
      %p74 = scmp.eq.s32.totalorder %s15, 1
      %p75 = scmp.ne.s32.totalorder %s70, %s72
      %p76 = scmp.eq.s32.totalorder %s15, 0
      %p77 = por %p75, %p76
      %p78 = scmp.ne.s32.totalorder %s70, %s72
      %p79 = scmp.eq.s32.totalorder %s20, 1
      %p80 = por %p78, %p79
      %p81 = scmp.ne.s32.totalorder %s72, %s73
      %p82 = scmp.eq.s32.totalorder %s20, 0
      %p83 = por %p81, %p82
      %p84 = scmp.ne.s32.totalorder %s72, %s73
      %p85 = scmp.eq.s32.totalorder %s21, 1
      %p86 = por %p84, %p85
      %p88 = scmp.ne.s32.totalorder %s73, %s87
      %p89 = scmp.eq.s32.totalorder %s21, 0
      %p90 = por %p88, %p89
      %s91 = ssub.s32 %s15, %s22
      %p92 = scmp.eq.s32.totalorder %s91, 0
      %s94 = sadd.s32 %s93, 1
      %s95 = scalar_select %p92, %s93, %s94
      %p98 = pneg %p92
      %p99 = scmp.eq.s32.totalorder %s15, 1
      %p100 = por %p98, %p99
      %p101 = scmp.ne.s32.totalorder %s93, %s96
      %p102 = scmp.eq.s32.totalorder %s15, 0
      %p103 = por %p101, %p102
      %p104 = scmp.ne.s32.totalorder %s93, %s96
      %p105 = scmp.eq.s32.totalorder %s20, 1
      %p106 = por %p104, %p105
      %p107 = scmp.ne.s32.totalorder %s96, %s97
      %p108 = scmp.eq.s32.totalorder %s20, 0
      %p109 = por %p107, %p108
      %p110 = scmp.ne.s32.totalorder %s96, %s97
      %p111 = scmp.eq.s32.totalorder %s21, 1
      %p112 = por %p110, %p111
      %p114 = scmp.ne.s32.totalorder %s97, %s113
      %p115 = scmp.eq.s32.totalorder %s21, 0
      %p116 = por %p114, %p115
      %p117 = scmp.le.s32.totalorder 1, %s15
      %p118 = scmp.lt.s32.totalorder %s15, 3
      %p119 = pnand %p117, %p118
      %p120 = pneg %p119
      // Predicated region
      $region9: #{tpu_custom_call.1} parent=5 // pred_check
        _
      $region10: #{tpu_custom_call.1} parent=5 // pred_check_branch
        %122 = sbr.rel (%p119) target = $region12
      $region11: #{tpu_custom_call.1} parent=5 // pred_region
        %s123 = ssub.s32 %s15, 1
        // Predicated region
        $region13: #{tpu_custom_call.1} parent=11 // pred_check
          %p124 = pneg %p62
        $region14: #{tpu_custom_call.1} parent=11 // pred_check_branch
          %126 = sbr.rel (%p124) target = $region16
        $region15: #{tpu_custom_call.1} parent=11 // pred_region
          _
        $region16: #{tpu_custom_call.1} parent=11 // pred_fallthru
          _
        // Predicated region
        $region17: #{tpu_custom_call.1} parent=11 // pred_check
          %p127 = pneg %p83
        $region18: #{tpu_custom_call.1} parent=11 // pred_check_branch
          %129 = sbr.rel (%p127) target = $region20
        $region19: #{tpu_custom_call.1} parent=11 // pred_region
          _
        $region20: #{tpu_custom_call.1} parent=11 // pred_fallthru
          _
      $region12: #{tpu_custom_call.1} parent=5 // pred_fallthru
        _
      %p130 = scmp.lt.s32.totalorder %s15, 2
      // Predicated region
      $region21: #{tpu_custom_call.1} parent=5 // pred_check
        %p131 = pneg %p130
      $region22: #{tpu_custom_call.1} parent=5 // pred_check_branch
        %133 = sbr.rel (%p131) target = $region24
      $region23: #{tpu_custom_call.1} parent=5 // pred_region
        // Predicated region
        $region25: #{tpu_custom_call.1} parent=23 // pred_check
          %p134 = pneg %p35
        $region26: #{tpu_custom_call.1} parent=23 // pred_check_branch
          %136 = sbr.rel (%p134) target = $region28
        $region27: #{tpu_custom_call.1} parent=23 // pred_region
          %s137 = sand.u32 %s25, 1
          %s138 = scalar_lea.sflag [#allocation3], %s137
          %s139 = sand.u32 %s25, 1
          %s140 = smul.addr %s139, 8
          %s141 = scalar_lea.vmem [#allocation2], %s140
          %s143 = ssub.s32 128, 128
          %144 = vsyncadd %s138, %s143
          %s145 = smul.addr %s15, 128
          %s146 = scalar_lea.hbm %s0, %s145
          %s148 = sshll.u32 %s141, 4
          %s149 = int_to_ptr.vmem [resolvable:$true] %s148
          %151 = dma.hbm_to_vmem [thread:$0]  %s146, 128, %s149, %s138
        $region28: #{tpu_custom_call.1} parent=23 // pred_fallthru
          _
      $region24: #{tpu_custom_call.1} parent=5 // pred_fallthru
        _
      %p152 = scmp.le.s32.totalorder 1, %s15
      %p153 = scmp.lt.s32.totalorder %s15, 3
      %p154 = pnand %p152, %p153
      %p155 = pneg %p154
      // Predicated region
      $region29: #{tpu_custom_call.1} parent=5 // pred_check
        _
      $region30: #{tpu_custom_call.1} parent=5 // pred_check_branch
        %157 = sbr.rel (%p154) target = $region32
      $region31: #{tpu_custom_call.1} parent=5 // pred_region
        %s158 = ssub.s32 %s15, 1
        %s159 = sand.u32 %s28, 1
        %s160 = scalar_lea.sflag [#allocation3], %s159
        %s161 = sand.u32 %s28, 1
        %s162 = smul.addr %s161, 8
        %s163 = scalar_lea.vmem [#allocation2], %s162
        // Predicated region
        $region33: #{tpu_custom_call.1} parent=31 // pred_check
          %p164 = pneg %p41
        $region34: #{tpu_custom_call.1} parent=31 // pred_check_branch
          %166 = sbr.rel (%p164) target = $region36
        $region35: #{tpu_custom_call.1} parent=31 // pred_region
          %167 = dma.done %s160, 128
        $region36: #{tpu_custom_call.1} parent=31 // pred_fallthru
          _
        %s168 = sand.u32 %s28, 1
        %s169 = scalar_lea.sflag [#allocation3], %s168
        %s170 = sand.u32 %s28, 1
        %s171 = smul.addr %s170, 8
        %s172 = scalar_lea.vmem [#allocation2], %s171
        %p173 = pneg %p41
        %p174 = pneg %p38
        %p175 = pneg %p62
        %p176 = pneg %p59
        %p177 = pneg %p83
        %p178 = pneg %p80
        %p179 = pneg %p109
        %p180 = pneg %p106
        %s181 = sand.u32 %s96, 1
        %s182 = scalar_lea.sflag [#allocation4], %s181
        %s183 = sand.u32 %s96, 1
        %s184 = smul.addr %s183, 4
        %s185 = scalar_lea.vmem [#allocation5], %s184
        %v186 = vld [vmem:[%s163] sm:$0xff]
        %vm187 = vcmask 261120
        %v188 = vsel %vm187, %v186, 0.0
        %189 = vadd.xlane.f32.xlu0 %v188
        %v190 = vpop.xlane.xlu0 %189
        %v191 = vrcp.pop 32.0
        %v192 = vmul.f32 %v190, %v191
        %v193 = vsub.f32 %v186, %v192
        %v194 = vmul.f32 %v193, %v193
        %v195 = vsel %vm187, %v194, 0.0
        %196 = vadd.xlane.f32.xlu0 %v195
        %v197 = vpop.xlane.xlu0 %196
        %v198 = vmul.f32 %v197, %v191
        %v199 = vadd.f32 %v198, 1e-12
        %v200 = vrsqrt.pop %v199
        %v201 = vmul.f32 %v193, %v200
        %v202 = vld [vmem:[%s1] sm:$0x1]
        %v204 = vlaneseq
        %v205 = vshrl.u32 %v204, 7
        %v206 = vsub.s32 0, %v205
        %v207 = vrot.slane %v202, %v206
        %v209 = vmul.f32 %v201, %v207
        %v210 = vld [vmem:[%s2] sm:$0x1]
        %v212 = vlaneseq
        %v213 = vshrl.u32 %v212, 7
        %v214 = vsub.s32 0, %v213
        %v215 = vrot.slane %v210, %v214
        %v217 = vadd.f32 %v209, %v215
        %v218 = vpack.c.bf16 %v217, %v217
        %vm219 = vcmask 257024
        %220 = vst.msk [vmem:[%s185] sm:$0xf] %vm219, %v218
        %s221 = sand.u32 %s96, 1
        %s222 = scalar_lea.sflag [#allocation4], %s221
        %s223 = sand.u32 %s96, 1
        %s224 = smul.addr %s223, 4
        %s225 = scalar_lea.vmem [#allocation5], %s224
        // Predicated region
        $region37: #{tpu_custom_call.1} parent=31 // pred_check
          %p226 = pneg %p106
        $region38: #{tpu_custom_call.1} parent=31 // pred_check_branch
          %228 = sbr.rel (%p226) target = $region40
        $region39: #{tpu_custom_call.1} parent=31 // pred_region
          %s230 = ssub.s32 64, 64
          %231 = vsyncadd %s222, %s230
          %s232 = smul.addr %s20, 64
          %s233 = scalar_lea.hbm %s3, %s232
          %s235 = sshll.u32 %s225, 4
          %s236 = int_to_ptr.vmem [resolvable:$true] %s235
          %238 = dma.vmem_to_hbm [thread:$0]  %s236, 64, %s233, %s222
        $region40: #{tpu_custom_call.1} parent=31 // pred_fallthru
          _
      $region32: #{tpu_custom_call.1} parent=5 // pred_fallthru
        _
      %p239 = scmp.le.s32.totalorder 2, %s15
      // Predicated region
      $region41: #{tpu_custom_call.1} parent=5 // pred_check
        %p240 = pneg %p239
      $region42: #{tpu_custom_call.1} parent=5 // pred_check_branch
        %242 = sbr.rel (%p240) target = $region44
      $region43: #{tpu_custom_call.1} parent=5 // pred_region
        %s243 = ssub.s32 %s15, 2
        // Predicated region
        $region45: #{tpu_custom_call.1} parent=43 // pred_check
          %p244 = pneg %p112
        $region46: #{tpu_custom_call.1} parent=43 // pred_check_branch
          %246 = sbr.rel (%p244) target = $region48
        $region47: #{tpu_custom_call.1} parent=43 // pred_region
          %s247 = sand.u32 %s97, 1
          %s248 = scalar_lea.sflag [#allocation4], %s247
          %s249 = sand.u32 %s97, 1
          %s250 = smul.addr %s249, 4
          %s251 = scalar_lea.vmem [#allocation5], %s250
          %252 = dma.done %s248, 64
        $region48: #{tpu_custom_call.1} parent=43 // pred_fallthru
          _
      $region44: #{tpu_custom_call.1} parent=5 // pred_fallthru
        _
    $region6: #{tpu_custom_call.1} parent=1 // loop_footer
      %s19 = sadd.s32 1, %s15
    $region7: #{tpu_custom_call.1} parent=1 // loop_footer_branch
      %14 = sbr.rel target = $region3
    $region8: #{tpu_custom_call.1} parent=1 // loop_exit
      _
    %253 = vsyncpa [#allocation3], 1
    %s254 = scalar_lea.sflag [#allocation3], 1
    %255 = vsyncpa %s254, 1
    %256 = vsyncpa [#allocation4], 1
    %s257 = scalar_lea.sflag [#allocation4], 1
    %258 = vsyncpa %s257, 1

</llo_original>
